<compile_context>
chip_gen: v5e
topology: v5e:2x2
jax: 0.10.0
libtpu: 0.0.40
codegen_flags: <defaults>
</compile_context>

<pallas_src>
import functools
import math

import jax
import jax.numpy as jnp
from jax.experimental import pallas as pl
from jax.experimental.pallas import tpu as pltpu

_SQRT2 = math.sqrt(2.0)


def _scaled_leaky_relu_kernel(x_ref, o_ref, *, pos_scale, neg_scale):
    x = x_ref[...]
    # leaky_relu fused with the sqrt(2) scale. Python-float scales are weakly
    # typed, so bf16 inputs stay bf16 end-to-end.
    o_ref[...] = jnp.where(x >= 0, x * pos_scale, x * neg_scale)


def _scaled_leaky_relu_jnp(x, negative_slope):
    """Fused XLA fallback: single HBM read+write pass, no custom-call cost."""
    xf = x if jnp.issubdtype(x.dtype, jnp.floating) else x.astype(jnp.float32)
    out = jnp.where(xf >= 0, xf * _SQRT2, xf * (float(negative_slope) * _SQRT2))
    return out.astype(x.dtype)


def scaled_leaky_relu_ref(x, negative_slope=0.2):
    return jnp.where(x >= 0, x, x * negative_slope) * _SQRT2


def _round_up(v, m):
    return ((v + m - 1) // m) * m


def _device_defaults():
    """(target_block_bytes, two_tensorcores) tuned per TPU generation."""
    try:
        kind = jax.devices()[0].device_kind.lower()
    except Exception:
        kind = ""
    if "v7" in kind:
        # 3.2 TB/s per TC -> big blocks amortize the ~0.35us/step overhead.
        # 4 x 8 MiB = 32 MiB footprint; scoped-VMEM limit raised below.
        return 8 << 20, True
    if "v6" in kind:
        return 4 << 20, False   # 16 MiB footprint < 32 MiB default scoped limit
    # v5e (16 MiB default scoped limit) or unknown generation: stay conservative.
    return 2 << 20, False


def _choose_block_rows(rows, target_rows, sub_mult, two_cores):
    """Pick a sublane-aligned block height.  On 2-TC chips keep the grid length
    even and the blocks balanced so both cores stream HBM."""
    if rows <= target_rows:
        if two_cores and rows > sub_mult:
            return _round_up(pl.cdiv(rows, 2), sub_mult)   # 2 balanced blocks
        return rows                                        # single full-dim block
    steps = pl.cdiv(rows, target_rows)
    if not two_cores:
        return target_rows
    if steps % 2:
        steps += 1                                         # even grid, balanced halves
    block = _round_up(pl.cdiv(rows, steps), sub_mult)
    # Sublane rounding can collapse the grid back to an odd length; nudge it
    # (bounded search — for long grids a residual odd step count costs ~1/grid).
    for _ in range(16):
        g = pl.cdiv(rows, block)
        if g <= 1 or g % 2 == 0:
            break
        new_block = _round_up(pl.cdiv(rows, g + 1), sub_mult)
        block = new_block if new_block < block else max(sub_mult, block - sub_mult)
    return block


def scaled_leaky_relu(x, negative_slope=0.2, *, target_block_bytes=None,
                      min_pallas_bytes=256 << 10):
    """ScaledLeakyReLU forward: leaky_relu(x, slope) * sqrt(2)."""
    orig_shape = x.shape
    n = x.size
    if n == 0:
        return jnp.zeros(orig_shape, x.dtype)

    dtype = x.dtype
    itemsize = jnp.dtype(dtype).itemsize

    # Non-float, tiny, or 128-unaligned inputs: let XLA fuse it (one HBM pass,
    # no pad/slice/cast passes, no pallas_call launch overhead).
    if (not jnp.issubdtype(dtype, jnp.floating)
            or n * itemsize < min_pallas_bytes
            or n % 128 != 0):
        # TODO(synk): integer inputs are outside the module's spec (PyTorch's
        # F.leaky_relu rejects them); they take the fused jnp path here.
        return _scaled_leaky_relu_jnp(x, negative_slope)

    auto_bytes, two_cores = _device_defaults()
    if target_block_bytes is None:
        target_block_bytes = auto_bytes

    # Lane width: widest multiple of 128 that divides n (lane-dense, no padding).
    lane = next(c for c in (1024, 512, 256, 128) if n % c == 0)
    rows = n // lane
    x2d = x.reshape(rows, lane)          # contiguous reshape, no data movement

    sub_mult = 32 // itemsize            # 8 f32 / 16 bf16 / 32 int8-fp8 packing
    target_rows = max(
        sub_mult,
        (target_block_bytes // (lane * itemsize)) // sub_mult * sub_mult)
    block_rows = _choose_block_rows(rows, target_rows, sub_mult, two_cores)
    grid = (pl.cdiv(rows, block_rows),)  # partial last block handled by Pallas

    # Raise the scoped-VMEM limit only when the double-buffered footprint
    # (2 bufs x (in + out) x block) would brush the default limit (v7x path).
    footprint = 4 * block_rows * lane * itemsize
    params = dict(dimension_semantics=("parallel",))
    if footprint > (24 << 20):
        params["vmem_limit_bytes"] = min(footprint + (16 << 20), 60 << 20)

    kernel = functools.partial(
        _scaled_leaky_relu_kernel,
        pos_scale=_SQRT2,
        neg_scale=float(negative_slope) * _SQRT2,
    )

    out2d = pl.pallas_call(
        kernel,
        out_shape=jax.ShapeDtypeStruct((rows, lane), dtype),
        grid_spec=pltpu.PrefetchScalarGridSpec(
            num_scalar_prefetch=0,
            grid=grid,
            in_specs=[pl.BlockSpec((block_rows, lane), lambda i: (i, 0))],
            out_specs=pl.BlockSpec((block_rows, lane), lambda i: (i, 0)),
        ),
        compiler_params=pltpu.CompilerParams(**params),
        cost_estimate=pl.CostEstimate(
            flops=2 * n, transcendentals=0, bytes_accessed=2 * n * itemsize),
    )(x2d)

    return out2d.reshape(orig_shape)


if __name__ == "__main__":
    slope = 0.2

    # NCHW input like the PyTorch module would see (batch=2, channels=4, 16x16).
    # Small -> takes the fused-XLA path by design.
    x_small = jax.random.normal(jax.random.PRNGKey(0), (2, 4, 16, 16), dtype=jnp.float32)
    out_small = jax.block_until_ready(scaled_leaky_relu(x_small, slope))
    assert out_small.shape == x_small.shape and out_small.dtype == x_small.dtype
    assert jnp.allclose(out_small, scaled_leaky_relu_ref(x_small, slope),
                        atol=1e-6, rtol=1e-6)

    # Larger f32 activation (512 KiB, 128-aligned) -> exercises the Pallas path.
    k1, k2 = jax.random.split(jax.random.PRNGKey(1))
    x_f32 = jax.random.normal(k1, (2, 16, 64, 64), dtype=jnp.float32)
    out_f32 = jax.block_until_ready(scaled_leaky_relu(x_f32, slope))
    assert out_f32.shape == x_f32.shape and out_f32.dtype == x_f32.dtype
    assert jnp.allclose(out_f32, scaled_leaky_relu_ref(x_f32, slope),
                        atol=1e-6, rtol=1e-6)

    # bf16 activation (common GFPGAN case) -> Pallas path, 16-row sublane multiple.
    x_bf16 = jax.random.normal(k2, (2, 8, 128, 128), dtype=jnp.bfloat16)
    out_bf16 = jax.block_until_ready(scaled_leaky_relu(x_bf16, slope))
    assert out_bf16.shape == x_bf16.shape and out_bf16.dtype == jnp.bfloat16
    assert jnp.allclose(out_bf16.astype(jnp.float32),
                        scaled_leaky_relu_ref(x_bf16.astype(jnp.float32), slope),
                        atol=2e-2, rtol=2e-2)

    # Unaligned element count -> fused-XLA fallback (no pad/slice HBM passes).
    x_odd = jax.random.normal(jax.random.PRNGKey(2), (3, 5, 7, 11), dtype=jnp.float32)
    out_odd = jax.block_until_ready(scaled_leaky_relu(x_odd, slope))
    assert jnp.allclose(out_odd, scaled_leaky_relu_ref(x_odd, slope),
                        atol=1e-6, rtol=1e-6)

    print("KERNEL_OK")
</pallas_src>

<mosaic_0001>
module attributes {stable_mosaic.version = 11 : i64} {
  func.func @_scaled_leaky_relu_kernel(%arg0: i32, %arg1: memref<128x1024xf32, #tpu.memory_space<vmem>>, %arg2: memref<128x1024xf32, #tpu.memory_space<vmem>>) attributes {dimension_semantics = [#tpu.dimension_semantics<parallel>], iteration_bounds = array<i64: 1>, scalar_prefetch = 0 : i64, scratch_operands = 0 : i64, tpu.core_type = #tpu.core_type<tc>, window_params = [{transform_indices = @transform_0, window_bounds = array<i64: 128, 1024>}, {transform_indices = @transform_1, window_bounds = array<i64: 128, 1024>}]} {
    %c0 = arith.constant 0 : index
    %c0_0 = arith.constant 0 : index
    %0 = vector.load %arg1[%c0, %c0_0] : memref<128x1024xf32, #tpu.memory_space<vmem>>, vector<128x1024xf32>
    %cst = arith.constant 0.000000e+00 : f32
    %1 = vector.broadcast %cst : f32 to vector<128x1024xf32>
    %2 = arith.cmpf oge, %0, %1 : vector<128x1024xf32>
    %cst_1 = arith.constant 1.41421354 : f32
    %3 = vector.broadcast %cst_1 : f32 to vector<128x1024xf32>
    %4 = arith.mulf %0, %3 : vector<128x1024xf32>
    %cst_2 = arith.constant 0.282842726 : f32
    %5 = vector.broadcast %cst_2 : f32 to vector<128x1024xf32>
    %6 = arith.mulf %0, %5 : vector<128x1024xf32>
    %7 = arith.select %2, %4, %6 : vector<128x1024xi1>, vector<128x1024xf32>
    %c0_3 = arith.constant 0 : index
    %c0_4 = arith.constant 0 : index
    %8 = vector.load %arg2[%c0_3, %c0_4] : memref<128x1024xf32, #tpu.memory_space<vmem>>, vector<128x1024xf32>
    tpu.vector_store %arg2[%c0_3, %c0_4], %7 {strides = array<i32>} : memref<128x1024xf32, #tpu.memory_space<vmem>>, vector<128x1024xf32>,
    return
  }
  func.func @transform_0(%arg0: i32) -> (i32, i32) {
    %c0_i32 = arith.constant 0 : i32
    %c0_i32_0 = arith.constant 0 : i32
    return %arg0, %c0_i32 : i32, i32
  }
  func.func @transform_1(%arg0: i32) -> (i32, i32) {
    %c0_i32 = arith.constant 0 : i32
    %c0_i32_0 = arith.constant 0 : i32
    return %arg0, %c0_i32 : i32, i32
  }
}

</mosaic_0001>

<llo_original>
// kernel: tpu_custom_call.1
$region0: #{tpu_custom_call.1}
  #allocation0 [shape = 'u32[]', space=smem, size = 0x4, offset = 0x4, fixed_abs, tag = 'smem constant byte address 0x4 - core index']
  #allocation1 [shape = 'u32[72,128]{1,0:T(1,128)}', space=vmem, size = 0x9000, scoped, tag = 'internal scratch']
  %s0 = inlined_call_operand.hbm [shape: f32[128,1024], index: 0, kind: input, shape index: {}]
  %s1 = inlined_call_operand.hbm [shape: f32[128,1024], index: 1, kind: output, shape index: {}]
  %s2 = sld [smem:[#allocation0]]
  $region18: #{tpu_custom_call.1} parent=0
    _
  %s4 = ssub.s32 1, %s2
  %s5 = scalar_select 0, %s4, %s2
  $region1: #{tpu_custom_call.1} parent=0
    #allocation2 [shape = 'u8[524288]{0}', space=vmem, size = 0x80000, scoped, tag = 'input window, operand 0, single buffered']
    #allocation3 [shape = 's32[1]{0}', space=sflag, size = 0x4, scoped, tag = 'scoped memory for tpu_custom_call.1']
    #allocation4 [shape = 's32[1]{0}', space=sflag, size = 0x4, scoped, tag = 'scoped memory for tpu_custom_call.1']
    #allocation5 [shape = 'u8[524288]{0}', space=vmem, size = 0x80000, scoped, tag = 'output window, operand 0, single buffered']
    %6 = vsyncpa [#allocation3], 0
    %7 = vsyncpa [#allocation4], 0
    // Predicated region
    $region2: #{tpu_custom_call.1} parent=1 // pred_check
      _
    $region3: #{tpu_custom_call.1} parent=1 // pred_check_branch
      %9 = sbr.rel (0) target = $region5
    $region4: #{tpu_custom_call.1} parent=1 // pred_region
      %11 = vsyncadd [#allocation3], 0
      %s12 = sshll.u32 %s0, 4
      %s13 = int_to_ptr.hbm [resolvable:$true] %s12
      %s14 = sshll.u32 [#allocation2], 4
      %s15 = int_to_ptr.vmem [resolvable:$true] %s14
      %20 = dma.hbm_to_vmem [thread:$0]  %s13, 16384, %s15, [#allocation3], 1024, 1024, 64
    $region5: #{tpu_custom_call.1} parent=1 // pred_fallthru
      _
    // Predicated region
    $region6: #{tpu_custom_call.1} parent=1 // pred_check
      _
    $region7: #{tpu_custom_call.1} parent=1 // pred_check_branch
      %22 = sbr.rel (0) target = $region9
    $region8: #{tpu_custom_call.1} parent=1 // pred_region
      %24 = dma.done [#allocation3], 16384
    $region9: #{tpu_custom_call.1} parent=1 // pred_fallthru
      _
    %v25 = vld [vmem:[#allocation2] sm:$0xff]
    %v26 = vld [vmem:[#allocation2 + $0x8] sm:$0xff]
    %v27 = vld [vmem:[#allocation2 + $0x10] sm:$0xff]
    %v28 = vld [vmem:[#allocation2 + $0x18] sm:$0xff]
    %v29 = vld [vmem:[#allocation2 + $0x20] sm:$0xff]
    %v30 = vld [vmem:[#allocation2 + $0x28] sm:$0xff]
    %v31 = vld [vmem:[#allocation2 + $0x30] sm:$0xff]
    %v32 = vld [vmem:[#allocation2 + $0x38] sm:$0xff]
    %v33 = vld [vmem:[#allocation2 + $0x40] sm:$0xff]
    %v34 = vld [vmem:[#allocation2 + $0x48] sm:$0xff]
    %v35 = vld [vmem:[#allocation2 + $0x50] sm:$0xff]
    %v36 = vld [vmem:[#allocation2 + $0x58] sm:$0xff]
    %v37 = vld [vmem:[#allocation2 + $0x60] sm:$0xff]
    %v38 = vld [vmem:[#allocation2 + $0x68] sm:$0xff]
    %v39 = vld [vmem:[#allocation2 + $0x70] sm:$0xff]
    %v40 = vld [vmem:[#allocation2 + $0x78] sm:$0xff]
    %v41 = vld [vmem:[#allocation2 + $0x80] sm:$0xff]
    %v42 = vld [vmem:[#allocation2 + $0x88] sm:$0xff]
    %v43 = vld [vmem:[#allocation2 + $0x90] sm:$0xff]
    %v44 = vld [vmem:[#allocation2 + $0x98] sm:$0xff]
    %v45 = vld [vmem:[#allocation2 + $0xa0] sm:$0xff]
    %v46 = vld [vmem:[#allocation2 + $0xa8] sm:$0xff]
    %v47 = vld [vmem:[#allocation2 + $0xb0] sm:$0xff]
    %v48 = vld [vmem:[#allocation2 + $0xb8] sm:$0xff]
    %v49 = vld [vmem:[#allocation2 + $0xc0] sm:$0xff]
    %v50 = vld [vmem:[#allocation2 + $0xc8] sm:$0xff]
    %v51 = vld [vmem:[#allocation2 + $0xd0] sm:$0xff]
    %v52 = vld [vmem:[#allocation2 + $0xd8] sm:$0xff]
    %v53 = vld [vmem:[#allocation2 + $0xe0] sm:$0xff]
    %v54 = vld [vmem:[#allocation2 + $0xe8] sm:$0xff]
    %v55 = vld [vmem:[#allocation2 + $0xf0] sm:$0xff]
    %v56 = vld [vmem:[#allocation2 + $0xf8] sm:$0xff]
    %v57 = vld [vmem:[#allocation2 + $0x100] sm:$0xff]
    %v58 = vld [vmem:[#allocation2 + $0x108] sm:$0xff]
    %v59 = vld [vmem:[#allocation2 + $0x110] sm:$0xff]
    %v60 = vld [vmem:[#allocation2 + $0x118] sm:$0xff]
    %v61 = vld [vmem:[#allocation2 + $0x120] sm:$0xff]
    %v62 = vld [vmem:[#allocation2 + $0x128] sm:$0xff]
    %v63 = vld [vmem:[#allocation2 + $0x130] sm:$0xff]
    %v64 = vld [vmem:[#allocation2 + $0x138] sm:$0xff]
    %v65 = vld [vmem:[#allocation2 + $0x140] sm:$0xff]
    %v66 = vld [vmem:[#allocation2 + $0x148] sm:$0xff]
    %v67 = vld [vmem:[#allocation2 + $0x150] sm:$0xff]
    %v68 = vld [vmem:[#allocation2 + $0x158] sm:$0xff]
    %v69 = vld [vmem:[#allocation2 + $0x160] sm:$0xff]
    %v70 = vld [vmem:[#allocation2 + $0x168] sm:$0xff]
    %v71 = vld [vmem:[#allocation2 + $0x170] sm:$0xff]
    %v72 = vld [vmem:[#allocation2 + $0x178] sm:$0xff]
    %v73 = vld [vmem:[#allocation2 + $0x180] sm:$0xff]
    %v74 = vld [vmem:[#allocation2 + $0x188] sm:$0xff]
    %v75 = vld [vmem:[#allocation2 + $0x190] sm:$0xff]
    %v76 = vld [vmem:[#allocation2 + $0x198] sm:$0xff]
    %v77 = vld [vmem:[#allocation2 + $0x1a0] sm:$0xff]
    %v78 = vld [vmem:[#allocation2 + $0x1a8] sm:$0xff]
    %v79 = vld [vmem:[#allocation2 + $0x1b0] sm:$0xff]
    %v80 = vld [vmem:[#allocation2 + $0x1b8] sm:$0xff]
    %v81 = vld [vmem:[#allocation2 + $0x1c0] sm:$0xff]
    %v82 = vld [vmem:[#allocation2 + $0x1c8] sm:$0xff]
    %v83 = vld [vmem:[#allocation2 + $0x1d0] sm:$0xff]
    %v84 = vld [vmem:[#allocation2 + $0x1d8] sm:$0xff]
    %v85 = vld [vmem:[#allocation2 + $0x1e0] sm:$0xff]
    %v86 = vld [vmem:[#allocation2 + $0x1e8] sm:$0xff]
    %v87 = vld [vmem:[#allocation2 + $0x1f0] sm:$0xff]
    %v88 = vld [vmem:[#allocation2 + $0x1f8] sm:$0xff]
    %v89 = vld [vmem:[#allocation2 + $0x200] sm:$0xff]
    %v90 = vld [vmem:[#allocation2 + $0x208] sm:$0xff]
    %v91 = vld [vmem:[#allocation2 + $0x210] sm:$0xff]
    %v92 = vld [vmem:[#allocation2 + $0x218] sm:$0xff]
    %v93 = vld [vmem:[#allocation2 + $0x220] sm:$0xff]
    %v94 = vld [vmem:[#allocation2 + $0x228] sm:$0xff]
    %v95 = vld [vmem:[#allocation2 + $0x230] sm:$0xff]
    %v96 = vld [vmem:[#allocation2 + $0x238] sm:$0xff]
    %v97 = vld [vmem:[#allocation2 + $0x240] sm:$0xff]
    %v98 = vld [vmem:[#allocation2 + $0x248] sm:$0xff]
    %v99 = vld [vmem:[#allocation2 + $0x250] sm:$0xff]
    %v100 = vld [vmem:[#allocation2 + $0x258] sm:$0xff]
    %v101 = vld [vmem:[#allocation2 + $0x260] sm:$0xff]
    %v102 = vld [vmem:[#allocation2 + $0x268] sm:$0xff]
    %v103 = vld [vmem:[#allocation2 + $0x270] sm:$0xff]
    %v104 = vld [vmem:[#allocation2 + $0x278] sm:$0xff]
    %v105 = vld [vmem:[#allocation2 + $0x280] sm:$0xff]
    %v106 = vld [vmem:[#allocation2 + $0x288] sm:$0xff]
    %v107 = vld [vmem:[#allocation2 + $0x290] sm:$0xff]
    %v108 = vld [vmem:[#allocation2 + $0x298] sm:$0xff]
    %v109 = vld [vmem:[#allocation2 + $0x2a0] sm:$0xff]
    %v110 = vld [vmem:[#allocation2 + $0x2a8] sm:$0xff]
    %v111 = vld [vmem:[#allocation2 + $0x2b0] sm:$0xff]
    %v112 = vld [vmem:[#allocation2 + $0x2b8] sm:$0xff]
    %v113 = vld [vmem:[#allocation2 + $0x2c0] sm:$0xff]
    %v114 = vld [vmem:[#allocation2 + $0x2c8] sm:$0xff]
    %v115 = vld [vmem:[#allocation2 + $0x2d0] sm:$0xff]
    %v116 = vld [vmem:[#allocation2 + $0x2d8] sm:$0xff]
    %v117 = vld [vmem:[#allocation2 + $0x2e0] sm:$0xff]
    %v118 = vld [vmem:[#allocation2 + $0x2e8] sm:$0xff]
    %v119 = vld [vmem:[#allocation2 + $0x2f0] sm:$0xff]
    %v120 = vld [vmem:[#allocation2 + $0x2f8] sm:$0xff]
    %v121 = vld [vmem:[#allocation2 + $0x300] sm:$0xff]
    %v122 = vld [vmem:[#allocation2 + $0x308] sm:$0xff]
    %v123 = vld [vmem:[#allocation2 + $0x310] sm:$0xff]
    %v124 = vld [vmem:[#allocation2 + $0x318] sm:$0xff]
    %v125 = vld [vmem:[#allocation2 + $0x320] sm:$0xff]
    %v126 = vld [vmem:[#allocation2 + $0x328] sm:$0xff]
    %v127 = vld [vmem:[#allocation2 + $0x330] sm:$0xff]
    %v128 = vld [vmem:[#allocation2 + $0x338] sm:$0xff]
    %v129 = vld [vmem:[#allocation2 + $0x340] sm:$0xff]
    %v130 = vld [vmem:[#allocation2 + $0x348] sm:$0xff]
    %v131 = vld [vmem:[#allocation2 + $0x350] sm:$0xff]
    %v132 = vld [vmem:[#allocation2 + $0x358] sm:$0xff]
    %v133 = vld [vmem:[#allocation2 + $0x360] sm:$0xff]
    %v134 = vld [vmem:[#allocation2 + $0x368] sm:$0xff]
    %v135 = vld [vmem:[#allocation2 + $0x370] sm:$0xff]
    %v136 = vld [vmem:[#allocation2 + $0x378] sm:$0xff]
    %v137 = vld [vmem:[#allocation2 + $0x380] sm:$0xff]
    %v138 = vld [vmem:[#allocation2 + $0x388] sm:$0xff]
    %v139 = vld [vmem:[#allocation2 + $0x390] sm:$0xff]
    %v140 = vld [vmem:[#allocation2 + $0x398] sm:$0xff]
    %v141 = vld [vmem:[#allocation2 + $0x3a0] sm:$0xff]
    %v142 = vld [vmem:[#allocation2 + $0x3a8] sm:$0xff]
    %v143 = vld [vmem:[#allocation2 + $0x3b0] sm:$0xff]
    %v144 = vld [vmem:[#allocation2 + $0x3b8] sm:$0xff]
    %v145 = vld [vmem:[#allocation2 + $0x3c0] sm:$0xff]
    %v146 = vld [vmem:[#allocation2 + $0x3c8] sm:$0xff]
    %v147 = vld [vmem:[#allocation2 + $0x3d0] sm:$0xff]
    %v148 = vld [vmem:[#allocation2 + $0x3d8] sm:$0xff]
    %v149 = vld [vmem:[#allocation2 + $0x3e0] sm:$0xff]
    %v150 = vld [vmem:[#allocation2 + $0x3e8] sm:$0xff]
    %v151 = vld [vmem:[#allocation2 + $0x3f0] sm:$0xff]
    %v152 = vld [vmem:[#allocation2 + $0x3f8] sm:$0xff]
    %vm153 = vcmp.ge.f32.partialorder %v25, 0.0
    %vm154 = vcmp.ge.f32.partialorder %v26, 0.0
    %vm155 = vcmp.ge.f32.partialorder %v27, 0.0
    %vm156 = vcmp.ge.f32.partialorder %v28, 0.0
    %vm157 = vcmp.ge.f32.partialorder %v29, 0.0
    %vm158 = vcmp.ge.f32.partialorder %v30, 0.0
    %vm159 = vcmp.ge.f32.partialorder %v31, 0.0
    %vm160 = vcmp.ge.f32.partialorder %v32, 0.0
    %vm161 = vcmp.ge.f32.partialorder %v33, 0.0
    %vm162 = vcmp.ge.f32.partialorder %v34, 0.0
    %vm163 = vcmp.ge.f32.partialorder %v35, 0.0
    %vm164 = vcmp.ge.f32.partialorder %v36, 0.0
    %vm165 = vcmp.ge.f32.partialorder %v37, 0.0
    %vm166 = vcmp.ge.f32.partialorder %v38, 0.0
    %vm167 = vcmp.ge.f32.partialorder %v39, 0.0
    %vm168 = vcmp.ge.f32.partialorder %v40, 0.0
    %vm169 = vcmp.ge.f32.partialorder %v41, 0.0
    %vm170 = vcmp.ge.f32.partialorder %v42, 0.0
    %vm171 = vcmp.ge.f32.partialorder %v43, 0.0
    %vm172 = vcmp.ge.f32.partialorder %v44, 0.0
    %vm173 = vcmp.ge.f32.partialorder %v45, 0.0
    %vm174 = vcmp.ge.f32.partialorder %v46, 0.0
    %vm175 = vcmp.ge.f32.partialorder %v47, 0.0
    %vm176 = vcmp.ge.f32.partialorder %v48, 0.0
    %vm177 = vcmp.ge.f32.partialorder %v49, 0.0
    %vm178 = vcmp.ge.f32.partialorder %v50, 0.0
    %vm179 = vcmp.ge.f32.partialorder %v51, 0.0
    %vm180 = vcmp.ge.f32.partialorder %v52, 0.0
    %vm181 = vcmp.ge.f32.partialorder %v53, 0.0
    %vm182 = vcmp.ge.f32.partialorder %v54, 0.0
    %vm183 = vcmp.ge.f32.partialorder %v55, 0.0
    %vm184 = vcmp.ge.f32.partialorder %v56, 0.0
    %vm185 = vcmp.ge.f32.partialorder %v57, 0.0
    %vm186 = vcmp.ge.f32.partialorder %v58, 0.0
    %vm187 = vcmp.ge.f32.partialorder %v59, 0.0
    %vm188 = vcmp.ge.f32.partialorder %v60, 0.0
    %vm189 = vcmp.ge.f32.partialorder %v61, 0.0
    %vm190 = vcmp.ge.f32.partialorder %v62, 0.0
    %vm191 = vcmp.ge.f32.partialorder %v63, 0.0
    %vm192 = vcmp.ge.f32.partialorder %v64, 0.0
    %vm193 = vcmp.ge.f32.partialorder %v65, 0.0
    %vm194 = vcmp.ge.f32.partialorder %v66, 0.0
    %vm195 = vcmp.ge.f32.partialorder %v67, 0.0
    %vm196 = vcmp.ge.f32.partialorder %v68, 0.0
    %vm197 = vcmp.ge.f32.partialorder %v69, 0.0
    %vm198 = vcmp.ge.f32.partialorder %v70, 0.0
    %vm199 = vcmp.ge.f32.partialorder %v71, 0.0
    %vm200 = vcmp.ge.f32.partialorder %v72, 0.0
    %vm201 = vcmp.ge.f32.partialorder %v73, 0.0
    %vm202 = vcmp.ge.f32.partialorder %v74, 0.0
    %vm203 = vcmp.ge.f32.partialorder %v75, 0.0
    %vm204 = vcmp.ge.f32.partialorder %v76, 0.0
    %vm205 = vcmp.ge.f32.partialorder %v77, 0.0
    %vm206 = vcmp.ge.f32.partialorder %v78, 0.0
    %vm207 = vcmp.ge.f32.partialorder %v79, 0.0
    %vm208 = vcmp.ge.f32.partialorder %v80, 0.0
    %vm209 = vcmp.ge.f32.partialorder %v81, 0.0
    %vm210 = vcmp.ge.f32.partialorder %v82, 0.0
    %vm211 = vcmp.ge.f32.partialorder %v83, 0.0
    %vm212 = vcmp.ge.f32.partialorder %v84, 0.0
    %vm213 = vcmp.ge.f32.partialorder %v85, 0.0
    %vm214 = vcmp.ge.f32.partialorder %v86, 0.0
    %vm215 = vcmp.ge.f32.partialorder %v87, 0.0
    %vm216 = vcmp.ge.f32.partialorder %v88, 0.0
    %vm217 = vcmp.ge.f32.partialorder %v89, 0.0
    %vm218 = vcmp.ge.f32.partialorder %v90, 0.0
    %vm219 = vcmp.ge.f32.partialorder %v91, 0.0
    %vm220 = vcmp.ge.f32.partialorder %v92, 0.0
    %vm221 = vcmp.ge.f32.partialorder %v93, 0.0
    %vm222 = vcmp.ge.f32.partialorder %v94, 0.0
    %vm223 = vcmp.ge.f32.partialorder %v95, 0.0
    %vm224 = vcmp.ge.f32.partialorder %v96, 0.0
    %vm225 = vcmp.ge.f32.partialorder %v97, 0.0
    %vm226 = vcmp.ge.f32.partialorder %v98, 0.0
    %vm227 = vcmp.ge.f32.partialorder %v99, 0.0
    %vm228 = vcmp.ge.f32.partialorder %v100, 0.0
    %vm229 = vcmp.ge.f32.partialorder %v101, 0.0
    %vm230 = vcmp.ge.f32.partialorder %v102, 0.0
    %vm231 = vcmp.ge.f32.partialorder %v103, 0.0
    %vm232 = vcmp.ge.f32.partialorder %v104, 0.0
    %vm233 = vcmp.ge.f32.partialorder %v105, 0.0
    %vm234 = vcmp.ge.f32.partialorder %v106, 0.0
    %vm235 = vcmp.ge.f32.partialorder %v107, 0.0
    %vm236 = vcmp.ge.f32.partialorder %v108, 0.0
    %vm237 = vcmp.ge.f32.partialorder %v109, 0.0
    %vm238 = vcmp.ge.f32.partialorder %v110, 0.0
    %vm239 = vcmp.ge.f32.partialorder %v111, 0.0
    %vm240 = vcmp.ge.f32.partialorder %v112, 0.0
    %vm241 = vcmp.ge.f32.partialorder %v113, 0.0
    %vm242 = vcmp.ge.f32.partialorder %v114, 0.0
    %vm243 = vcmp.ge.f32.partialorder %v115, 0.0
    %vm244 = vcmp.ge.f32.partialorder %v116, 0.0
    %vm245 = vcmp.ge.f32.partialorder %v117, 0.0
    %vm246 = vcmp.ge.f32.partialorder %v118, 0.0
    %vm247 = vcmp.ge.f32.partialorder %v119, 0.0
    %vm248 = vcmp.ge.f32.partialorder %v120, 0.0
    %vm249 = vcmp.ge.f32.partialorder %v121, 0.0
    %vm250 = vcmp.ge.f32.partialorder %v122, 0.0
    %vm251 = vcmp.ge.f32.partialorder %v123, 0.0
    %vm252 = vcmp.ge.f32.partialorder %v124, 0.0
    %vm253 = vcmp.ge.f32.partialorder %v125, 0.0
    %vm254 = vcmp.ge.f32.partialorder %v126, 0.0
    %vm255 = vcmp.ge.f32.partialorder %v127, 0.0
    %vm256 = vcmp.ge.f32.partialorder %v128, 0.0
    %vm257 = vcmp.ge.f32.partialorder %v129, 0.0
    %vm258 = vcmp.ge.f32.partialorder %v130, 0.0
    %vm259 = vcmp.ge.f32.partialorder %v131, 0.0
    %vm260 = vcmp.ge.f32.partialorder %v132, 0.0
    %vm261 = vcmp.ge.f32.partialorder %v133, 0.0
    %vm262 = vcmp.ge.f32.partialorder %v134, 0.0
    %vm263 = vcmp.ge.f32.partialorder %v135, 0.0
    %vm264 = vcmp.ge.f32.partialorder %v136, 0.0
    %vm265 = vcmp.ge.f32.partialorder %v137, 0.0
    %vm266 = vcmp.ge.f32.partialorder %v138, 0.0
    %vm267 = vcmp.ge.f32.partialorder %v139, 0.0
    %vm268 = vcmp.ge.f32.partialorder %v140, 0.0
    %vm269 = vcmp.ge.f32.partialorder %v141, 0.0
    %vm270 = vcmp.ge.f32.partialorder %v142, 0.0
    %vm271 = vcmp.ge.f32.partialorder %v143, 0.0
    %vm272 = vcmp.ge.f32.partialorder %v144, 0.0
    %vm273 = vcmp.ge.f32.partialorder %v145, 0.0
    %vm274 = vcmp.ge.f32.partialorder %v146, 0.0
    %vm275 = vcmp.ge.f32.partialorder %v147, 0.0
    %vm276 = vcmp.ge.f32.partialorder %v148, 0.0
    %vm277 = vcmp.ge.f32.partialorder %v149, 0.0
    %vm278 = vcmp.ge.f32.partialorder %v150, 0.0
    %vm279 = vcmp.ge.f32.partialorder %v151, 0.0
    %vm280 = vcmp.ge.f32.partialorder %v152, 0.0
    %v281 = vmul.f32 %v25, 1.4142135
    %v282 = vmul.f32 %v26, 1.4142135
    %v283 = vmul.f32 %v27, 1.4142135
    %v284 = vmul.f32 %v28, 1.4142135
    %v285 = vmul.f32 %v29, 1.4142135
    %v286 = vmul.f32 %v30, 1.4142135
    %v287 = vmul.f32 %v31, 1.4142135
    %v288 = vmul.f32 %v32, 1.4142135
    %v289 = vmul.f32 %v33, 1.4142135
    %v290 = vmul.f32 %v34, 1.4142135
    %v291 = vmul.f32 %v35, 1.4142135
    %v292 = vmul.f32 %v36, 1.4142135
    %v293 = vmul.f32 %v37, 1.4142135
    %v294 = vmul.f32 %v38, 1.4142135
    %v295 = vmul.f32 %v39, 1.4142135
    %v296 = vmul.f32 %v40, 1.4142135
    %v297 = vmul.f32 %v41, 1.4142135
    %v298 = vmul.f32 %v42, 1.4142135
    %v299 = vmul.f32 %v43, 1.4142135
    %v300 = vmul.f32 %v44, 1.4142135
    %v301 = vmul.f32 %v45, 1.4142135
    %v302 = vmul.f32 %v46, 1.4142135
    %v303 = vmul.f32 %v47, 1.4142135
    %v304 = vmul.f32 %v48, 1.4142135
    %v305 = vmul.f32 %v49, 1.4142135
    %v306 = vmul.f32 %v50, 1.4142135
    %v307 = vmul.f32 %v51, 1.4142135
    %v308 = vmul.f32 %v52, 1.4142135
    %v309 = vmul.f32 %v53, 1.4142135
    %v310 = vmul.f32 %v54, 1.4142135
    %v311 = vmul.f32 %v55, 1.4142135
    %v312 = vmul.f32 %v56, 1.4142135
    %v313 = vmul.f32 %v57, 1.4142135
    %v314 = vmul.f32 %v58, 1.4142135
    %v315 = vmul.f32 %v59, 1.4142135
    %v316 = vmul.f32 %v60, 1.4142135
    %v317 = vmul.f32 %v61, 1.4142135
    %v318 = vmul.f32 %v62, 1.4142135
    %v319 = vmul.f32 %v63, 1.4142135
    %v320 = vmul.f32 %v64, 1.4142135
    %v321 = vmul.f32 %v65, 1.4142135
    %v322 = vmul.f32 %v66, 1.4142135
    %v323 = vmul.f32 %v67, 1.4142135
    %v324 = vmul.f32 %v68, 1.4142135
    %v325 = vmul.f32 %v69, 1.4142135
    %v326 = vmul.f32 %v70, 1.4142135
    %v327 = vmul.f32 %v71, 1.4142135
    %v328 = vmul.f32 %v72, 1.4142135
    %v329 = vmul.f32 %v73, 1.4142135
    %v330 = vmul.f32 %v74, 1.4142135
    %v331 = vmul.f32 %v75, 1.4142135
    %v332 = vmul.f32 %v76, 1.4142135
    %v333 = vmul.f32 %v77, 1.4142135
    %v334 = vmul.f32 %v78, 1.4142135
    %v335 = vmul.f32 %v79, 1.4142135
    %v336 = vmul.f32 %v80, 1.4142135
    %v337 = vmul.f32 %v81, 1.4142135
    %v338 = vmul.f32 %v82, 1.4142135
    %v339 = vmul.f32 %v83, 1.4142135
    %v340 = vmul.f32 %v84, 1.4142135
    %v341 = vmul.f32 %v85, 1.4142135
    %v342 = vmul.f32 %v86, 1.4142135
    %v343 = vmul.f32 %v87, 1.4142135
    %v344 = vmul.f32 %v88, 1.4142135
    %v345 = vmul.f32 %v89, 1.4142135
    %v346 = vmul.f32 %v90, 1.4142135
    %v347 = vmul.f32 %v91, 1.4142135
    %v348 = vmul.f32 %v92, 1.4142135
    %v349 = vmul.f32 %v93, 1.4142135
    %v350 = vmul.f32 %v94, 1.4142135
    %v351 = vmul.f32 %v95, 1.4142135
    %v352 = vmul.f32 %v96, 1.4142135
    %v353 = vmul.f32 %v97, 1.4142135
    %v354 = vmul.f32 %v98, 1.4142135
    %v355 = vmul.f32 %v99, 1.4142135
    %v356 = vmul.f32 %v100, 1.4142135
    %v357 = vmul.f32 %v101, 1.4142135
    %v358 = vmul.f32 %v102, 1.4142135
    %v359 = vmul.f32 %v103, 1.4142135
    %v360 = vmul.f32 %v104, 1.4142135
    %v361 = vmul.f32 %v105, 1.4142135
    %v362 = vmul.f32 %v106, 1.4142135
    %v363 = vmul.f32 %v107, 1.4142135
    %v364 = vmul.f32 %v108, 1.4142135
    %v365 = vmul.f32 %v109, 1.4142135
    %v366 = vmul.f32 %v110, 1.4142135
    %v367 = vmul.f32 %v111, 1.4142135
    %v368 = vmul.f32 %v112, 1.4142135
    %v369 = vmul.f32 %v113, 1.4142135
    %v370 = vmul.f32 %v114, 1.4142135
    %v371 = vmul.f32 %v115, 1.4142135
    %v372 = vmul.f32 %v116, 1.4142135
    %v373 = vmul.f32 %v117, 1.4142135
    %v374 = vmul.f32 %v118, 1.4142135
    %v375 = vmul.f32 %v119, 1.4142135
    %v376 = vmul.f32 %v120, 1.4142135
    %v377 = vmul.f32 %v121, 1.4142135
    %v378 = vmul.f32 %v122, 1.4142135
    %v379 = vmul.f32 %v123, 1.4142135
    %v380 = vmul.f32 %v124, 1.4142135
    %v381 = vmul.f32 %v125, 1.4142135
    %v382 = vmul.f32 %v126, 1.4142135
    %v383 = vmul.f32 %v127, 1.4142135
    %v384 = vmul.f32 %v128, 1.4142135
    %v385 = vmul.f32 %v129, 1.4142135
    %v386 = vmul.f32 %v130, 1.4142135
    %v387 = vmul.f32 %v131, 1.4142135
    %v388 = vmul.f32 %v132, 1.4142135
    %v389 = vmul.f32 %v133, 1.4142135
    %v390 = vmul.f32 %v134, 1.4142135
    %v391 = vmul.f32 %v135, 1.4142135
    %v392 = vmul.f32 %v136, 1.4142135
    %v393 = vmul.f32 %v137, 1.4142135
    %v394 = vmul.f32 %v138, 1.4142135
    %v395 = vmul.f32 %v139, 1.4142135
    %v396 = vmul.f32 %v140, 1.4142135
    %v397 = vmul.f32 %v141, 1.4142135
    %v398 = vmul.f32 %v142, 1.4142135
    %v399 = vmul.f32 %v143, 1.4142135
    %v400 = vmul.f32 %v144, 1.4142135
    %v401 = vmul.f32 %v145, 1.4142135
    %v402 = vmul.f32 %v146, 1.4142135
    %v403 = vmul.f32 %v147, 1.4142135
    %v404 = vmul.f32 %v148, 1.4142135
    %v405 = vmul.f32 %v149, 1.4142135
    %v406 = vmul.f32 %v150, 1.4142135
    %v407 = vmul.f32 %v151, 1.4142135
    %v408 = vmul.f32 %v152, 1.4142135
    %v409 = vmul.f32 %v25, 0.28284273
    %v410 = vmul.f32 %v26, 0.28284273
    %v411 = vmul.f32 %v27, 0.28284273
    %v412 = vmul.f32 %v28, 0.28284273
    %v413 = vmul.f32 %v29, 0.28284273
    %v414 = vmul.f32 %v30, 0.28284273
    %v415 = vmul.f32 %v31, 0.28284273
    %v416 = vmul.f32 %v32, 0.28284273
    %v417 = vmul.f32 %v33, 0.28284273
    %v418 = vmul.f32 %v34, 0.28284273
    %v419 = vmul.f32 %v35, 0.28284273
    %v420 = vmul.f32 %v36, 0.28284273
    %v421 = vmul.f32 %v37, 0.28284273
    %v422 = vmul.f32 %v38, 0.28284273
    %v423 = vmul.f32 %v39, 0.28284273
    %v424 = vmul.f32 %v40, 0.28284273
    %v425 = vmul.f32 %v41, 0.28284273
    %v426 = vmul.f32 %v42, 0.28284273
    %v427 = vmul.f32 %v43, 0.28284273
    %v428 = vmul.f32 %v44, 0.28284273
    %v429 = vmul.f32 %v45, 0.28284273
    %v430 = vmul.f32 %v46, 0.28284273
    %v431 = vmul.f32 %v47, 0.28284273
    %v432 = vmul.f32 %v48, 0.28284273
    %v433 = vmul.f32 %v49, 0.28284273
    %v434 = vmul.f32 %v50, 0.28284273
    %v435 = vmul.f32 %v51, 0.28284273
    %v436 = vmul.f32 %v52, 0.28284273
    %v437 = vmul.f32 %v53, 0.28284273
    %v438 = vmul.f32 %v54, 0.28284273
    %v439 = vmul.f32 %v55, 0.28284273
    %v440 = vmul.f32 %v56, 0.28284273
    %v441 = vmul.f32 %v57, 0.28284273
    %v442 = vmul.f32 %v58, 0.28284273
    %v443 = vmul.f32 %v59, 0.28284273
    %v444 = vmul.f32 %v60, 0.28284273
    %v445 = vmul.f32 %v61, 0.28284273
    %v446 = vmul.f32 %v62, 0.28284273
    %v447 = vmul.f32 %v63, 0.28284273
    %v448 = vmul.f32 %v64, 0.28284273
    %v449 = vmul.f32 %v65, 0.28284273
    %v450 = vmul.f32 %v66, 0.28284273
    %v451 = vmul.f32 %v67, 0.28284273
    %v452 = vmul.f32 %v68, 0.28284273
    %v453 = vmul.f32 %v69, 0.28284273
    %v454 = vmul.f32 %v70, 0.28284273
    %v455 = vmul.f32 %v71, 0.28284273
    %v456 = vmul.f32 %v72, 0.28284273
    %v457 = vmul.f32 %v73, 0.28284273
    %v458 = vmul.f32 %v74, 0.28284273
    %v459 = vmul.f32 %v75, 0.28284273
    %v460 = vmul.f32 %v76, 0.28284273
    %v461 = vmul.f32 %v77, 0.28284273
    %v462 = vmul.f32 %v78, 0.28284273
    %v463 = vmul.f32 %v79, 0.28284273
    %v464 = vmul.f32 %v80, 0.28284273
    %v465 = vmul.f32 %v81, 0.28284273
    %v466 = vmul.f32 %v82, 0.28284273
    %v467 = vmul.f32 %v83, 0.28284273
    %v468 = vmul.f32 %v84, 0.28284273
    %v469 = vmul.f32 %v85, 0.28284273
    %v470 = vmul.f32 %v86, 0.28284273
    %v471 = vmul.f32 %v87, 0.28284273
    %v472 = vmul.f32 %v88, 0.28284273
    %v473 = vmul.f32 %v89, 0.28284273
    %v474 = vmul.f32 %v90, 0.28284273
    %v475 = vmul.f32 %v91, 0.28284273
    %v476 = vmul.f32 %v92, 0.28284273
    %v477 = vmul.f32 %v93, 0.28284273
    %v478 = vmul.f32 %v94, 0.28284273
    %v479 = vmul.f32 %v95, 0.28284273
    %v480 = vmul.f32 %v96, 0.28284273
    %v481 = vmul.f32 %v97, 0.28284273
    %v482 = vmul.f32 %v98, 0.28284273
    %v483 = vmul.f32 %v99, 0.28284273
    %v484 = vmul.f32 %v100, 0.28284273
    %v485 = vmul.f32 %v101, 0.28284273
    %v486 = vmul.f32 %v102, 0.28284273
    %v487 = vmul.f32 %v103, 0.28284273
    %v488 = vmul.f32 %v104, 0.28284273
    %v489 = vmul.f32 %v105, 0.28284273
    %v490 = vmul.f32 %v106, 0.28284273
    %v491 = vmul.f32 %v107, 0.28284273
    %v492 = vmul.f32 %v108, 0.28284273
    %v493 = vmul.f32 %v109, 0.28284273
    %v494 = vmul.f32 %v110, 0.28284273
    %v495 = vmul.f32 %v111, 0.28284273
    %v496 = vmul.f32 %v112, 0.28284273
    %v497 = vmul.f32 %v113, 0.28284273
    %v498 = vmul.f32 %v114, 0.28284273
    %v499 = vmul.f32 %v115, 0.28284273
    %v500 = vmul.f32 %v116, 0.28284273
    %v501 = vmul.f32 %v117, 0.28284273
    %v502 = vmul.f32 %v118, 0.28284273
    %v503 = vmul.f32 %v119, 0.28284273
    %v504 = vmul.f32 %v120, 0.28284273
    %v505 = vmul.f32 %v121, 0.28284273
    %v506 = vmul.f32 %v122, 0.28284273
    %v507 = vmul.f32 %v123, 0.28284273
    %v508 = vmul.f32 %v124, 0.28284273
    %v509 = vmul.f32 %v125, 0.28284273
    %v510 = vmul.f32 %v126, 0.28284273
    %v511 = vmul.f32 %v127, 0.28284273
    %v512 = vmul.f32 %v128, 0.28284273
    %v513 = vmul.f32 %v129, 0.28284273
    %v514 = vmul.f32 %v130, 0.28284273
    %v515 = vmul.f32 %v131, 0.28284273
    %v516 = vmul.f32 %v132, 0.28284273
    %v517 = vmul.f32 %v133, 0.28284273
    %v518 = vmul.f32 %v134, 0.28284273
    %v519 = vmul.f32 %v135, 0.28284273
    %v520 = vmul.f32 %v136, 0.28284273
    %v521 = vmul.f32 %v137, 0.28284273
    %v522 = vmul.f32 %v138, 0.28284273
    %v523 = vmul.f32 %v139, 0.28284273
    %v524 = vmul.f32 %v140, 0.28284273
    %v525 = vmul.f32 %v141, 0.28284273
    %v526 = vmul.f32 %v142, 0.28284273
    %v527 = vmul.f32 %v143, 0.28284273
    %v528 = vmul.f32 %v144, 0.28284273
    %v529 = vmul.f32 %v145, 0.28284273
    %v530 = vmul.f32 %v146, 0.28284273
    %v531 = vmul.f32 %v147, 0.28284273
    %v532 = vmul.f32 %v148, 0.28284273
    %v533 = vmul.f32 %v149, 0.28284273
    %v534 = vmul.f32 %v150, 0.28284273
    %v535 = vmul.f32 %v151, 0.28284273
    %v536 = vmul.f32 %v152, 0.28284273
    %v537 = vsel %vm153, %v281, %v409
    %v538 = vsel %vm154, %v282, %v410
    %v539 = vsel %vm155, %v283, %v411
    %v540 = vsel %vm156, %v284, %v412
    %v541 = vsel %vm157, %v285, %v413
    %v542 = vsel %vm158, %v286, %v414
    %v543 = vsel %vm159, %v287, %v415
    %v544 = vsel %vm160, %v288, %v416
    %v545 = vsel %vm161, %v289, %v417
    %v546 = vsel %vm162, %v290, %v418
    %v547 = vsel %vm163, %v291, %v419
    %v548 = vsel %vm164, %v292, %v420
    %v549 = vsel %vm165, %v293, %v421
    %v550 = vsel %vm166, %v294, %v422
    %v551 = vsel %vm167, %v295, %v423
    %v552 = vsel %vm168, %v296, %v424
    %v553 = vsel %vm169, %v297, %v425
    %v554 = vsel %vm170, %v298, %v426
    %v555 = vsel %vm171, %v299, %v427
    %v556 = vsel %vm172, %v300, %v428
    %v557 = vsel %vm173, %v301, %v429
    %v558 = vsel %vm174, %v302, %v430
    %v559 = vsel %vm175, %v303, %v431
    %v560 = vsel %vm176, %v304, %v432
    %v561 = vsel %vm177, %v305, %v433
    %v562 = vsel %vm178, %v306, %v434
    %v563 = vsel %vm179, %v307, %v435
    %v564 = vsel %vm180, %v308, %v436
    %v565 = vsel %vm181, %v309, %v437
    %v566 = vsel %vm182, %v310, %v438
    %v567 = vsel %vm183, %v311, %v439
    %v568 = vsel %vm184, %v312, %v440
    %v569 = vsel %vm185, %v313, %v441
    %v570 = vsel %vm186, %v314, %v442
    %v571 = vsel %vm187, %v315, %v443
    %v572 = vsel %vm188, %v316, %v444
    %v573 = vsel %vm189, %v317, %v445
    %v574 = vsel %vm190, %v318, %v446
    %v575 = vsel %vm191, %v319, %v447
    %v576 = vsel %vm192, %v320, %v448
    %v577 = vsel %vm193, %v321, %v449
    %v578 = vsel %vm194, %v322, %v450
    %v579 = vsel %vm195, %v323, %v451
    %v580 = vsel %vm196, %v324, %v452
    %v581 = vsel %vm197, %v325, %v453
    %v582 = vsel %vm198, %v326, %v454
    %v583 = vsel %vm199, %v327, %v455
    %v584 = vsel %vm200, %v328, %v456
    %v585 = vsel %vm201, %v329, %v457
    %v586 = vsel %vm202, %v330, %v458
    %v587 = vsel %vm203, %v331, %v459
    %v588 = vsel %vm204, %v332, %v460
    %v589 = vsel %vm205, %v333, %v461
    %v590 = vsel %vm206, %v334, %v462
    %v591 = vsel %vm207, %v335, %v463
    %v592 = vsel %vm208, %v336, %v464
    %v593 = vsel %vm209, %v337, %v465
    %v594 = vsel %vm210, %v338, %v466
    %v595 = vsel %vm211, %v339, %v467
    %v596 = vsel %vm212, %v340, %v468
    %v597 = vsel %vm213, %v341, %v469
    %v598 = vsel %vm214, %v342, %v470
    %v599 = vsel %vm215, %v343, %v471
    %v600 = vsel %vm216, %v344, %v472
    %v601 = vsel %vm217, %v345, %v473
    %v602 = vsel %vm218, %v346, %v474
    %v603 = vsel %vm219, %v347, %v475
    %v604 = vsel %vm220, %v348, %v476
    %v605 = vsel %vm221, %v349, %v477
    %v606 = vsel %vm222, %v350, %v478
    %v607 = vsel %vm223, %v351, %v479
    %v608 = vsel %vm224, %v352, %v480
    %v609 = vsel %vm225, %v353, %v481
    %v610 = vsel %vm226, %v354, %v482
    %v611 = vsel %vm227, %v355, %v483
    %v612 = vsel %vm228, %v356, %v484
    %v613 = vsel %vm229, %v357, %v485
    %v614 = vsel %vm230, %v358, %v486
    %v615 = vsel %vm231, %v359, %v487
    %v616 = vsel %vm232, %v360, %v488
    %v617 = vsel %vm233, %v361, %v489
    %v618 = vsel %vm234, %v362, %v490
    %v619 = vsel %vm235, %v363, %v491
    %v620 = vsel %vm236, %v364, %v492
    %v621 = vsel %vm237, %v365, %v493
    %v622 = vsel %vm238, %v366, %v494
    %v623 = vsel %vm239, %v367, %v495
    %v624 = vsel %vm240, %v368, %v496
    %v625 = vsel %vm241, %v369, %v497
    %v626 = vsel %vm242, %v370, %v498
    %v627 = vsel %vm243, %v371, %v499
    %v628 = vsel %vm244, %v372, %v500
    %v629 = vsel %vm245, %v373, %v501
    %v630 = vsel %vm246, %v374, %v502
    %v631 = vsel %vm247, %v375, %v503
    %v632 = vsel %vm248, %v376, %v504
    %v633 = vsel %vm249, %v377, %v505
    %v634 = vsel %vm250, %v378, %v506
    %v635 = vsel %vm251, %v379, %v507
    %v636 = vsel %vm252, %v380, %v508
    %v637 = vsel %vm253, %v381, %v509
    %v638 = vsel %vm254, %v382, %v510
    %v639 = vsel %vm255, %v383, %v511
    %v640 = vsel %vm256, %v384, %v512
    %v641 = vsel %vm257, %v385, %v513
    %v642 = vsel %vm258, %v386, %v514
    %v643 = vsel %vm259, %v387, %v515
    %v644 = vsel %vm260, %v388, %v516
    %v645 = vsel %vm261, %v389, %v517
    %v646 = vsel %vm262, %v390, %v518
    %v647 = vsel %vm263, %v391, %v519
    %v648 = vsel %vm264, %v392, %v520
    %v649 = vsel %vm265, %v393, %v521
    %v650 = vsel %vm266, %v394, %v522
    %v651 = vsel %vm267, %v395, %v523
    %v652 = vsel %vm268, %v396, %v524
    %v653 = vsel %vm269, %v397, %v525
    %v654 = vsel %vm270, %v398, %v526
    %v655 = vsel %vm271, %v399, %v527
    %v656 = vsel %vm272, %v400, %v528
    %v657 = vsel %vm273, %v401, %v529
    %v658 = vsel %vm274, %v402, %v530
    %v659 = vsel %vm275, %v403, %v531
    %v660 = vsel %vm276, %v404, %v532
    %v661 = vsel %vm277, %v405, %v533
    %v662 = vsel %vm278, %v406, %v534
    %v663 = vsel %vm279, %v407, %v535
    %v664 = vsel %vm280, %v408, %v536
    %665 = vst [vmem:[#allocation5] sm:$0xff] %v537
    %666 = vst [vmem:[#allocation5 + $0x8] sm:$0xff] %v538
    %667 = vst [vmem:[#allocation5 + $0x10] sm:$0xff] %v539
    %668 = vst [vmem:[#allocation5 + $0x18] sm:$0xff] %v540
    %669 = vst [vmem:[#allocation5 + $0x20] sm:$0xff] %v541
    %670 = vst [vmem:[#allocation5 + $0x28] sm:$0xff] %v542
    %671 = vst [vmem:[#allocation5 + $0x30] sm:$0xff] %v543
    %672 = vst [vmem:[#allocation5 + $0x38] sm:$0xff] %v544
    %673 = vst [vmem:[#allocation5 + $0x40] sm:$0xff] %v545
    %674 = vst [vmem:[#allocation5 + $0x48] sm:$0xff] %v546
    %675 = vst [vmem:[#allocation5 + $0x50] sm:$0xff] %v547
    %676 = vst [vmem:[#allocation5 + $0x58] sm:$0xff] %v548
    %677 = vst [vmem:[#allocation5 + $0x60] sm:$0xff] %v549
    %678 = vst [vmem:[#allocation5 + $0x68] sm:$0xff] %v550
    %679 = vst [vmem:[#allocation5 + $0x70] sm:$0xff] %v551
    %680 = vst [vmem:[#allocation5 + $0x78] sm:$0xff] %v552
    %681 = vst [vmem:[#allocation5 + $0x80] sm:$0xff] %v553
    %682 = vst [vmem:[#allocation5 + $0x88] sm:$0xff] %v554
    %683 = vst [vmem:[#allocation5 + $0x90] sm:$0xff] %v555
    %684 = vst [vmem:[#allocation5 + $0x98] sm:$0xff] %v556
    %685 = vst [vmem:[#allocation5 + $0xa0] sm:$0xff] %v557
    %686 = vst [vmem:[#allocation5 + $0xa8] sm:$0xff] %v558
    %687 = vst [vmem:[#allocation5 + $0xb0] sm:$0xff] %v559
    %688 = vst [vmem:[#allocation5 + $0xb8] sm:$0xff] %v560
    %689 = vst [vmem:[#allocation5 + $0xc0] sm:$0xff] %v561
    %690 = vst [vmem:[#allocation5 + $0xc8] sm:$0xff] %v562
    %691 = vst [vmem:[#allocation5 + $0xd0] sm:$0xff] %v563
    %692 = vst [vmem:[#allocation5 + $0xd8] sm:$0xff] %v564
    %693 = vst [vmem:[#allocation5 + $0xe0] sm:$0xff] %v565
    %694 = vst [vmem:[#allocation5 + $0xe8] sm:$0xff] %v566
    %695 = vst [vmem:[#allocation5 + $0xf0] sm:$0xff] %v567
    %696 = vst [vmem:[#allocation5 + $0xf8] sm:$0xff] %v568
    %697 = vst [vmem:[#allocation5 + $0x100] sm:$0xff] %v569
    %698 = vst [vmem:[#allocation5 + $0x108] sm:$0xff] %v570
    %699 = vst [vmem:[#allocation5 + $0x110] sm:$0xff] %v571
    %700 = vst [vmem:[#allocation5 + $0x118] sm:$0xff] %v572
    %701 = vst [vmem:[#allocation5 + $0x120] sm:$0xff] %v573
    %702 = vst [vmem:[#allocation5 + $0x128] sm:$0xff] %v574
    %703 = vst [vmem:[#allocation5 + $0x130] sm:$0xff] %v575
    %704 = vst [vmem:[#allocation5 + $0x138] sm:$0xff] %v576
    %705 = vst [vmem:[#allocation5 + $0x140] sm:$0xff] %v577
    %706 = vst [vmem:[#allocation5 + $0x148] sm:$0xff] %v578
    %707 = vst [vmem:[#allocation5 + $0x150] sm:$0xff] %v579
    %708 = vst [vmem:[#allocation5 + $0x158] sm:$0xff] %v580
    %709 = vst [vmem:[#allocation5 + $0x160] sm:$0xff] %v581
    %710 = vst [vmem:[#allocation5 + $0x168] sm:$0xff] %v582
    %711 = vst [vmem:[#allocation5 + $0x170] sm:$0xff] %v583
    %712 = vst [vmem:[#allocation5 + $0x178] sm:$0xff] %v584
    %713 = vst [vmem:[#allocation5 + $0x180] sm:$0xff] %v585
    %714 = vst [vmem:[#allocation5 + $0x188] sm:$0xff] %v586
    %715 = vst [vmem:[#allocation5 + $0x190] sm:$0xff] %v587
    %716 = vst [vmem:[#allocation5 + $0x198] sm:$0xff] %v588
    %717 = vst [vmem:[#allocation5 + $0x1a0] sm:$0xff] %v589
    %718 = vst [vmem:[#allocation5 + $0x1a8] sm:$0xff] %v590
    %719 = vst [vmem:[#allocation5 + $0x1b0] sm:$0xff] %v591
    %720 = vst [vmem:[#allocation5 + $0x1b8] sm:$0xff] %v592
    %721 = vst [vmem:[#allocation5 + $0x1c0] sm:$0xff] %v593
    %722 = vst [vmem:[#allocation5 + $0x1c8] sm:$0xff] %v594
    %723 = vst [vmem:[#allocation5 + $0x1d0] sm:$0xff] %v595
    %724 = vst [vmem:[#allocation5 + $0x1d8] sm:$0xff] %v596
    %725 = vst [vmem:[#allocation5 + $0x1e0] sm:$0xff] %v597
    %726 = vst [vmem:[#allocation5 + $0x1e8] sm:$0xff] %v598
    %727 = vst [vmem:[#allocation5 + $0x1f0] sm:$0xff] %v599
    %728 = vst [vmem:[#allocation5 + $0x1f8] sm:$0xff] %v600
    %729 = vst [vmem:[#allocation5 + $0x200] sm:$0xff] %v601
    %730 = vst [vmem:[#allocation5 + $0x208] sm:$0xff] %v602
    %731 = vst [vmem:[#allocation5 + $0x210] sm:$0xff] %v603
    %732 = vst [vmem:[#allocation5 + $0x218] sm:$0xff] %v604
    %733 = vst [vmem:[#allocation5 + $0x220] sm:$0xff] %v605
    %734 = vst [vmem:[#allocation5 + $0x228] sm:$0xff] %v606
    %735 = vst [vmem:[#allocation5 + $0x230] sm:$0xff] %v607
    %736 = vst [vmem:[#allocation5 + $0x238] sm:$0xff] %v608
    %737 = vst [vmem:[#allocation5 + $0x240] sm:$0xff] %v609
    %738 = vst [vmem:[#allocation5 + $0x248] sm:$0xff] %v610
    %739 = vst [vmem:[#allocation5 + $0x250] sm:$0xff] %v611
    %740 = vst [vmem:[#allocation5 + $0x258] sm:$0xff] %v612
    %741 = vst [vmem:[#allocation5 + $0x260] sm:$0xff] %v613
    %742 = vst [vmem:[#allocation5 + $0x268] sm:$0xff] %v614
    %743 = vst [vmem:[#allocation5 + $0x270] sm:$0xff] %v615
    %744 = vst [vmem:[#allocation5 + $0x278] sm:$0xff] %v616
    %745 = vst [vmem:[#allocation5 + $0x280] sm:$0xff] %v617
    %746 = vst [vmem:[#allocation5 + $0x288] sm:$0xff] %v618
    %747 = vst [vmem:[#allocation5 + $0x290] sm:$0xff] %v619
    %748 = vst [vmem:[#allocation5 + $0x298] sm:$0xff] %v620
    %749 = vst [vmem:[#allocation5 + $0x2a0] sm:$0xff] %v621
    %750 = vst [vmem:[#allocation5 + $0x2a8] sm:$0xff] %v622
    %751 = vst [vmem:[#allocation5 + $0x2b0] sm:$0xff] %v623
    %752 = vst [vmem:[#allocation5 + $0x2b8] sm:$0xff] %v624
    %753 = vst [vmem:[#allocation5 + $0x2c0] sm:$0xff] %v625
    %754 = vst [vmem:[#allocation5 + $0x2c8] sm:$0xff] %v626
    %755 = vst [vmem:[#allocation5 + $0x2d0] sm:$0xff] %v627
    %756 = vst [vmem:[#allocation5 + $0x2d8] sm:$0xff] %v628
    %757 = vst [vmem:[#allocation5 + $0x2e0] sm:$0xff] %v629
    %758 = vst [vmem:[#allocation5 + $0x2e8] sm:$0xff] %v630
    %759 = vst [vmem:[#allocation5 + $0x2f0] sm:$0xff] %v631
    %760 = vst [vmem:[#allocation5 + $0x2f8] sm:$0xff] %v632
    %761 = vst [vmem:[#allocation5 + $0x300] sm:$0xff] %v633
    %762 = vst [vmem:[#allocation5 + $0x308] sm:$0xff] %v634
    %763 = vst [vmem:[#allocation5 + $0x310] sm:$0xff] %v635
    %764 = vst [vmem:[#allocation5 + $0x318] sm:$0xff] %v636
    %765 = vst [vmem:[#allocation5 + $0x320] sm:$0xff] %v637
    %766 = vst [vmem:[#allocation5 + $0x328] sm:$0xff] %v638
    %767 = vst [vmem:[#allocation5 + $0x330] sm:$0xff] %v639
    %768 = vst [vmem:[#allocation5 + $0x338] sm:$0xff] %v640
    %769 = vst [vmem:[#allocation5 + $0x340] sm:$0xff] %v641
    %770 = vst [vmem:[#allocation5 + $0x348] sm:$0xff] %v642
    %771 = vst [vmem:[#allocation5 + $0x350] sm:$0xff] %v643
    %772 = vst [vmem:[#allocation5 + $0x358] sm:$0xff] %v644
    %773 = vst [vmem:[#allocation5 + $0x360] sm:$0xff] %v645
    %774 = vst [vmem:[#allocation5 + $0x368] sm:$0xff] %v646
    %775 = vst [vmem:[#allocation5 + $0x370] sm:$0xff] %v647
    %776 = vst [vmem:[#allocation5 + $0x378] sm:$0xff] %v648
    %777 = vst [vmem:[#allocation5 + $0x380] sm:$0xff] %v649
    %778 = vst [vmem:[#allocation5 + $0x388] sm:$0xff] %v650
    %779 = vst [vmem:[#allocation5 + $0x390] sm:$0xff] %v651
    %780 = vst [vmem:[#allocation5 + $0x398] sm:$0xff] %v652
    %781 = vst [vmem:[#allocation5 + $0x3a0] sm:$0xff] %v653
    %782 = vst [vmem:[#allocation5 + $0x3a8] sm:$0xff] %v654
    %783 = vst [vmem:[#allocation5 + $0x3b0] sm:$0xff] %v655
    %784 = vst [vmem:[#allocation5 + $0x3b8] sm:$0xff] %v656
    %785 = vst [vmem:[#allocation5 + $0x3c0] sm:$0xff] %v657
    %786 = vst [vmem:[#allocation5 + $0x3c8] sm:$0xff] %v658
    %787 = vst [vmem:[#allocation5 + $0x3d0] sm:$0xff] %v659
    %788 = vst [vmem:[#allocation5 + $0x3d8] sm:$0xff] %v660
    %789 = vst [vmem:[#allocation5 + $0x3e0] sm:$0xff] %v661
    %790 = vst [vmem:[#allocation5 + $0x3e8] sm:$0xff] %v662
    %791 = vst [vmem:[#allocation5 + $0x3f0] sm:$0xff] %v663
    %792 = vst [vmem:[#allocation5 + $0x3f8] sm:$0xff] %v664
    // Predicated region
    $region10: #{tpu_custom_call.1} parent=1 // pred_check
      _
    $region11: #{tpu_custom_call.1} parent=1 // pred_check_branch
      %794 = sbr.rel (0) target = $region13
    $region12: #{tpu_custom_call.1} parent=1 // pred_region
      %796 = vsyncadd [#allocation4], 0
      %s797 = sshll.u32 [#allocation5], 4
      %s798 = int_to_ptr.vmem [resolvable:$true] %s797
      %s799 = sshll.u32 %s1, 4
      %s800 = int_to_ptr.hbm [resolvable:$true] %s799
      %805 = dma.vmem_to_hbm [thread:$0]  %s798, 16384, %s800, [#allocation4], 1024, 1024, 64
    $region13: #{tpu_custom_call.1} parent=1 // pred_fallthru
      _
    // Predicated region
    $region14: #{tpu_custom_call.1} parent=1 // pred_check
      _
    $region15: #{tpu_custom_call.1} parent=1 // pred_check_branch
      %807 = sbr.rel (0) target = $region17
    $region16: #{tpu_custom_call.1} parent=1 // pred_region
      %809 = dma.done [#allocation4], 16384
    $region17: #{tpu_custom_call.1} parent=1 // pred_fallthru
      _
    %810 = vsyncpa [#allocation3], 1
    %811 = vsyncpa [#allocation4], 1

</llo_original>
